<compile_context>
chip_gen: v5e
topology: v5e:2x2
jax: 0.10.0
libtpu: 0.0.40
codegen_flags: <defaults>
</compile_context>

<pallas_src>
import math

import jax
import jax.numpy as jnp
from jax.experimental import pallas as pl
from jax.experimental.pallas import tpu as pltpu


# ---------------------------------------------------------------------------
# Generation-aware VMEM budgeting and tile sizing.
# ---------------------------------------------------------------------------

_LANE_PAD_BYTES = 512          # a (rows, 1) f32 block is lane-padded to 128 lanes


def _vmem_capacity_bytes():
    try:
        return int(pltpu.get_tpu_info().vmem_capacity_bytes)
    except Exception:
        return 64 << 20        # conservative default (v7x: 64 MiB per core)


def _round16(x):
    return max(16, (int(x) // 16) * 16)          # bf16 sublane tile is 16


def _choose_tile_n(n_rows, per_row_bytes, tile_budget_bytes):
    """Largest n-tile whose per-step VMEM window fits the budget, preferring a
    divisor of n_rows (no ragged tile -> no in-kernel row mask)."""
    max_tile = max(16, tile_budget_bytes // max(per_row_bytes, 1))
    if max_tile >= n_rows:
        return n_rows                            # single tile, never ragged
    tile = _round16(min(max_tile, n_rows))
    for t in range(tile, 15, -16):               # prefer an exact divisor
        if n_rows % t == 0:
            return t
    return tile                                  # ragged tail, masked in-kernel


def _fixed_vmem_bytes(p):
    # (1,p,p) f32 output block (x2 buffers) + d_row (1,p) / d_col (p,1)
    # operands (sublane/lane padded, x2 buffers) + headroom for compiler scratch.
    return (2 * p * p * 4
            + 2 * 8 * p * 4
            + 2 * p * _LANE_PAD_BYTES
            + (2 << 20))


def _vmem_limit_bytes(limit_cap, fixed, per_row, tile_n):
    needed = fixed + per_row * tile_n
    return int(min(limit_cap, max(32 << 20, int(needed * 1.25))))


# ---------------------------------------------------------------------------
# Kernel A: weighted sample covariance with X streamed from HBM.
# ---------------------------------------------------------------------------

def _make_scov_kernel(mxu_dtype, n_rows, tile_n, mask_ragged):
    def kernel(x_ref, w_ref, drow_ref, dcol_ref, o_ref):
        # x_ref:    (1, tile_n, p)   X tile for batch i, n-tile k (any float dtype)
        # w_ref:    (tile_n, 1) f32  per-sample weights Wsq (sublane-major)
        # drow_ref: (1, p) f32       d / sqrt(n)  (lane-aligned)
        # dcol_ref: (p, 1) f32       d / sqrt(n)  (sublane-aligned)
        # o_ref:    (1, p, p) f32    VMEM-resident output block (same block for all k)
        k = pl.program_id(1)

        @pl.when(k == 0)
        def _init():
            o_ref[...] = jnp.zeros_like(o_ref)

        # Weight the samples in f32, cast the MXU operand once (f32 accumulate).
        xs = x_ref[0].astype(jnp.float32) * w_ref[...]
        if mask_ragged:
            # Ragged last tile: rows past n_rows read unspecified data, so zero
            # them explicitly (do NOT rely on w==0: garbage * 0 may be NaN).
            row = k * tile_n + jax.lax.broadcasted_iota(jnp.int32, (tile_n, 1), 0)
            xs = jnp.where(row < n_rows, xs, 0.0)
        xs = xs.astype(mxu_dtype)

        # Transpose-free Gram: contract over the sample (sublane) axis.
        # TODO(synk): confirm via pl.lower_as_mlir that no vxpose is emitted;
        # if one appears, switch to pl.dot(xs, xs, trans_a=True).
        o_ref[0] += jax.lax.dot_general(
            xs, xs, (((0,), (0,)), ((), ())),
            preferred_element_type=jnp.float32)

        @pl.when(k == pl.num_programs(1) - 1)
        def _finalize():
            # diag(d) and 1/n (folded into d) hoisted out of the n-loop and
            # applied once, in f32.  The torch NaN-zeroing pass is dropped:
            # inputs here are finite by construction.
            o_ref[0] = o_ref[0] * dcol_ref[...] * drow_ref[...]

    return kernel


def wesper_ld_sample_cov(X, Wsq, d, n, *, tile_n=None, mxu_dtype=jnp.bfloat16):
    """S[i] = diag(d) @ (Wsq*X[i])^T @ (Wsq*X[i]) @ diag(d) / n  (f32 output).

    X streams from HBM in its own dtype (pass bf16 to halve the dominant HBM
    stream); MXU operands are `mxu_dtype` with f32 accumulation.
    """
    b, n_rows, p = X.shape
    x_itemsize = X.dtype.itemsize

    limit_cap = int(_vmem_capacity_bytes() * 0.85)
    fixed = _fixed_vmem_bytes(p)
    # Per-row VMEM: double-buffered X tile + lane-padded (tile_n,1) w tile
    # + in-kernel f32/bf16 temporaries of the weighted tile.
    per_row = 2 * (p * x_itemsize + _LANE_PAD_BYTES) + 3 * p * 4

    if tile_n is None:
        tile_n = _choose_tile_n(n_rows, per_row,
                                max(4 << 20, int(limit_cap * 0.7) - fixed))
    else:
        tile_n = min(int(tile_n), n_rows)
        if tile_n < n_rows:
            tile_n = _round16(tile_n)
    n_tiles = pl.cdiv(n_rows, tile_n)
    mask_ragged = (n_tiles * tile_n != n_rows)     # no jnp.pad copy of X

    vmem_limit = _vmem_limit_bytes(limit_cap, fixed, per_row, tile_n)

    # Tiny operands: per-sample weights (sublane-major) and d with 1/sqrt(n)
    # folded in, so the final d (x) d scaling also applies the 1/n.
    w_col = Wsq.astype(jnp.float32).reshape(n_rows, 1)
    d_scaled = d.astype(jnp.float32).reshape(-1) * (1.0 / math.sqrt(float(n)))
    d_row = d_scaled.reshape(1, p)
    d_col = d_scaled.reshape(p, 1)

    kernel = _make_scov_kernel(mxu_dtype, n_rows, tile_n, mask_ragged)

    cost = pl.CostEstimate(
        flops=2 * b * n_rows * p * p,
        transcendentals=0,
        bytes_accessed=X.size * x_itemsize + b * n_rows * 4 + b * p * p * 4)

    return pl.pallas_call(
        kernel,
        out_shape=jax.ShapeDtypeStruct((b, p, p), jnp.float32),
        grid_spec=pltpu.PrefetchScalarGridSpec(
            num_scalar_prefetch=0,
            grid=(b, n_tiles),                               # reduction (n) last
            in_specs=[
                pl.BlockSpec((1, tile_n, p), lambda i, k: (i, k, 0)),
                pl.BlockSpec((tile_n, 1), lambda i, k: (k, 0)),
                pl.BlockSpec((1, p), lambda i, k: (0, 0)),
                pl.BlockSpec((p, 1), lambda i, k: (0, 0)),
            ],
            out_specs=pl.BlockSpec((1, p, p), lambda i, k: (i, 0, 0)),
        ),
        compiler_params=pltpu.CompilerParams(
            dimension_semantics=("parallel", "arbitrary"),
            vmem_limit_bytes=vmem_limit,
        ),
        cost_estimate=cost,
    )(X, w_col, d_row, d_col)


# ---------------------------------------------------------------------------
# Kernel B: same covariance with X ~ N(0,1) generated inside the kernel
# (Box-Muller on pltpu.prng_random_bits) - the (b, n, p) array never hits HBM.
# ---------------------------------------------------------------------------

def _bits_to_unit_interval(bits_u32):
    # Mantissa trick: uint32 -> f32 in [0, 1) without an int->float convert.
    mant = jnp.right_shift(bits_u32, jnp.uint32(9))
    f = pltpu.bitcast(jnp.bitwise_or(mant, jnp.uint32(0x3F800000)), jnp.float32)
    return f - 1.0


def _random_u32(shape):
    raw = pltpu.prng_random_bits(shape)
    if raw.dtype.name != "uint32":
        raw = pltpu.bitcast(raw, jnp.uint32)
    return raw


def _standard_normal_tile(shape):
    # Box-Muller: log/sqrt/cos run on the otherwise-idle EUP/VPU slots.
    u1 = 1.0 - _bits_to_unit_interval(_random_u32(shape))    # (0, 1], log-safe
    u2 = _bits_to_unit_interval(_random_u32(shape))           # [0, 1)
    r = jnp.sqrt(-2.0 * jnp.log(u1))
    return r * jnp.cos((2.0 * math.pi) * u2)


def _make_rng_scov_kernel(mxu_dtype, n_rows, tile_n, p, mask_ragged):
    def kernel(seed_ref, w_ref, drow_ref, dcol_ref, o_ref):
        i = pl.program_id(0)
        k = pl.program_id(1)
        nk = pl.num_programs(1)

        @pl.when(k == 0)
        def _init():
            o_ref[...] = jnp.zeros_like(o_ref)

        # Distinct stream per (batch, n-tile).
        pltpu.prng_seed(seed_ref[0] + i * nk + k)
        z = _standard_normal_tile((tile_n, p))

        xs = z * w_ref[...]
        if mask_ragged:
            row = k * tile_n + jax.lax.broadcasted_iota(jnp.int32, (tile_n, 1), 0)
            xs = jnp.where(row < n_rows, xs, 0.0)
        xs = xs.astype(mxu_dtype)

        o_ref[0] += jax.lax.dot_general(
            xs, xs, (((0,), (0,)), ((), ())),
            preferred_element_type=jnp.float32)

        @pl.when(k == nk - 1)
        def _finalize():
            o_ref[0] = o_ref[0] * dcol_ref[...] * drow_ref[...]

    return kernel


def wesper_ld_sample_cov_rng(seed, Wsq, d, n, b, p, *, tile_n=None,
                             mxu_dtype=jnp.bfloat16):
    n_rows = int(Wsq.shape[0])

    limit_cap = int(_vmem_capacity_bytes() * 0.85)
    fixed = _fixed_vmem_bytes(p)
    # Lane-padded (tile_n,1) w tile + ~7 live f32 tile-sized RNG temporaries.
    per_row = 2 * _LANE_PAD_BYTES + 7 * p * 4

    if tile_n is None:
        tile_n = _choose_tile_n(n_rows, per_row,
                                max(4 << 20, int(limit_cap * 0.7) - fixed))
    else:
        tile_n = min(int(tile_n), n_rows)
        if tile_n < n_rows:
            tile_n = _round16(tile_n)
    n_tiles = pl.cdiv(n_rows, tile_n)
    mask_ragged = (n_tiles * tile_n != n_rows)

    vmem_limit = _vmem_limit_bytes(limit_cap, fixed, per_row, tile_n)

    seed_arr = jnp.asarray(seed, dtype=jnp.int32).reshape(-1)[:1]
    w_col = Wsq.astype(jnp.float32).reshape(n_rows, 1)
    d_scaled = d.astype(jnp.float32).reshape(-1) * (1.0 / math.sqrt(float(n)))
    d_row = d_scaled.reshape(1, p)
    d_col = d_scaled.reshape(p, 1)

    kernel = _make_rng_scov_kernel(mxu_dtype, n_rows, tile_n, p, mask_ragged)

    cost = pl.CostEstimate(
        flops=2 * b * n_rows * p * p,
        transcendentals=3 * b * n_rows * p,
        bytes_accessed=b * n_rows * 4 + b * p * p * 4)

    return pl.pallas_call(
        kernel,
        out_shape=jax.ShapeDtypeStruct((b, p, p), jnp.float32),
        grid_spec=pltpu.PrefetchScalarGridSpec(
            num_scalar_prefetch=1,                           # seed -> SMEM
            grid=(b, n_tiles),
            in_specs=[
                pl.BlockSpec((tile_n, 1), lambda i, k, s: (k, 0)),
                pl.BlockSpec((1, p), lambda i, k, s: (0, 0)),
                pl.BlockSpec((p, 1), lambda i, k, s: (0, 0)),
            ],
            out_specs=pl.BlockSpec((1, p, p), lambda i, k, s: (i, 0, 0)),
        ),
        compiler_params=pltpu.CompilerParams(
            dimension_semantics=("parallel", "arbitrary"),
            vmem_limit_bytes=vmem_limit,
        ),
        cost_estimate=cost,
    )(seed_arr, w_col, d_row, d_col)


# ---------------------------------------------------------------------------
# Full forward.
# ---------------------------------------------------------------------------

def wesper_ld_forward(logtau, Wsq, p, n, b, key, *, mxu_dtype=jnp.bfloat16,
                      in_kernel_rng=True):
    """JAX/Pallas equivalent of WeSpeR_LD_model.forward().

    torch draws X in (<= p)-row chunks when n > p; the sum of the chunk
    covariances equals one (b, n, p) draw, so a single tiled n-reduction
    covers both branches.  Returns lambda_: (b, p) ascending eigenvalues.
    """
    d = jnp.sqrt(jnp.sort(jnp.exp(logtau)))          # diag of sq_cov, (p,)

    S = None
    if in_kernel_rng:
        # Preferred path: X is generated inside the kernel, so the (b, n, p)
        # array - the dominant HBM traffic - never leaves VMEM.  If the PRNG /
        # trig lowering is unavailable on this TPU generation, silently fall
        # back to streaming a bf16 X from HBM.
        try:
            seed = jax.random.randint(key, (1,), 0, jnp.iinfo(jnp.int32).max,
                                      dtype=jnp.int32)
            S = jax.block_until_ready(
                wesper_ld_sample_cov_rng(seed, Wsq, d, n, b, p,
                                         mxu_dtype=mxu_dtype))
        except Exception:
            S = None
    if S is None:
        # bf16 halves the HBM stream of the largest array; generated directly
        # in bf16 (no separate cast/pad pass over HBM).
        X = jax.random.normal(key, (b, n, p), dtype=jnp.bfloat16)
        S = wesper_ld_sample_cov(X, Wsq, d, n, mxu_dtype=mxu_dtype)

    # S is symmetric PSD and finite, so torch's eigvals(S).real sorted
    # ascending == eigvalsh (ascending); the torch NaN-zeroing pass is a no-op.
    # TODO(synk): eigendecomposition has no Pallas/TPU kernel equivalent;
    # eigvalsh runs as a regular XLA op.
    return jnp.linalg.eigvalsh(S)


# ---------------------------------------------------------------------------
# Demo / validation.
# ---------------------------------------------------------------------------

if __name__ == "__main__":
    p, n, b = 128, 384, 2
    key = jax.random.PRNGKey(0)
    k_tau, k_w, k_x = jax.random.split(key, 3)

    tau_init = jnp.exp(jax.random.normal(k_tau, (p,), dtype=jnp.float32) * 0.3) + 0.5
    logtau = jnp.log(tau_init)
    Wsq = jnp.abs(jax.random.normal(k_w, (n,), dtype=jnp.float32)) * 0.5 + 0.75
    d = jnp.sqrt(jnp.sort(jnp.exp(logtau)))

    def ref_cov(Xf):
        Xs = Xf * Wsq[None, :, None]
        G = jnp.einsum("bnp,bnq->bpq", Xs, Xs,
                       precision=jax.lax.Precision.HIGHEST)
        return d[None, :, None] * G * d[None, None, :] / float(n)

    X32 = jax.random.normal(k_x, (b, n, p), dtype=jnp.float32)

    # (a) f32 MXU path, multi-tile n-reduction (384 = 3 x 128).
    S_f32 = jax.block_until_ready(
        wesper_ld_sample_cov(X32, Wsq, d, n, tile_n=128, mxu_dtype=jnp.float32))
    assert bool(jnp.allclose(S_f32, ref_cov(X32), rtol=5e-3, atol=5e-3))

    # (b) bf16 HBM streaming + bf16 MXU (default perf path), ragged last tile
    #     (384 = 2 x 160 + 64) exercising the in-kernel row mask (no jnp.pad).
    Xb = X32.astype(jnp.bfloat16)
    S_bf = jax.block_until_ready(wesper_ld_sample_cov(Xb, Wsq, d, n, tile_n=160))
    assert bool(jnp.allclose(S_bf, ref_cov(Xb.astype(jnp.float32)),
                             rtol=3e-2, atol=1e-2))

    # Full forward: in-kernel-RNG covariance (bf16 fallback) + eigvalsh.
    lam = jax.block_until_ready(wesper_ld_forward(logtau, Wsq, p, n, b, k_x))
    assert lam.shape == (b, p)
    assert bool(jnp.all(jnp.isfinite(lam)))
    assert bool(jnp.all(lam[:, 1:] >= lam[:, :-1]))        # ascending, like torch

    # Distributional sanity: mean eigenvalue == trace(S)/p ~= mean(tau)*mean(Wsq^2).
    expected = float(jnp.mean(jnp.exp(logtau)) * jnp.mean(Wsq ** 2))
    observed = float(jnp.mean(lam))
    assert 0.7 * expected < observed < 1.3 * expected

    print("KERNEL_OK")
</pallas_src>

<mosaic_0001>
module attributes {stable_mosaic.version = 11 : i64} {
  func.func @kernel(%arg0: i32, %arg1: i32, %arg2: memref<1x128x128xf32, #tpu.memory_space<vmem>>, %arg3: memref<128x1xf32, #tpu.memory_space<vmem>>, %arg4: memref<1x128xf32, #tpu.memory_space<vmem>>, %arg5: memref<128x1xf32, #tpu.memory_space<vmem>>, %arg6: memref<1x128x128xf32, #tpu.memory_space<vmem>>) attributes {dimension_semantics = [#tpu.dimension_semantics<parallel>, #tpu.dimension_semantics<arbitrary>], iteration_bounds = array<i64: 2, 3>, scalar_prefetch = 0 : i64, scratch_operands = 0 : i64, tpu.core_type = #tpu.core_type<tc>, window_params = [{transform_indices = @transform_0, window_bounds = array<i64: 1, 128, 128>}, {transform_indices = @transform_1, window_bounds = array<i64: 128, 1>}, {pipeline_mode = #tpu.pipeline_mode<synchronous>, transform_indices = @transform_2, window_bounds = array<i64: 1, 128>}, {pipeline_mode = #tpu.pipeline_mode<synchronous>, transform_indices = @transform_3, window_bounds = array<i64: 128, 1>}, {transform_indices = @transform_4, window_bounds = array<i64: 1, 128, 128>}]} {
    %c0_i32 = arith.constant 0 : i32
    %0 = arith.cmpi eq, %arg1, %c0_i32 : i32
    %1 = arith.extui %0 : i1 to i32
    %c0_i32_0 = arith.constant 0 : i32
    %2 = arith.cmpi ne, %1, %c0_i32_0 : i32
    scf.if %2 {
      %cst_12 = arith.constant 0.000000e+00 : f32
      %18 = vector.broadcast %cst_12 : f32 to vector<1x128x128xf32>
      %c0_13 = arith.constant 0 : index
      %c0_14 = arith.constant 0 : index
      %c0_15 = arith.constant 0 : index
      %19 = vector.load %arg6[%c0_13, %c0_14, %c0_15] : memref<1x128x128xf32, #tpu.memory_space<vmem>>, vector<1x128x128xf32>
      tpu.vector_store %arg6[%c0_13, %c0_14, %c0_15], %18 {strides = array<i32>} : memref<1x128x128xf32, #tpu.memory_space<vmem>>, vector<1x128x128xf32>,
    } else {
    }
    %c0 = arith.constant 0 : index
    %c0_1 = arith.constant 0 : index
    %c0_2 = arith.constant 0 : index
    %3 = vector.load %arg2[%c0, %c0_1, %c0_2] : memref<1x128x128xf32, #tpu.memory_space<vmem>>, vector<1x128x128xf32>
    %4 = vector.shape_cast %3 : vector<1x128x128xf32> to vector<128x128xf32>
    %c0_3 = arith.constant 0 : index
    %c0_4 = arith.constant 0 : index
    %5 = vector.load %arg3[%c0_3, %c0_4] : memref<128x1xf32, #tpu.memory_space<vmem>>, vector<128x1xf32>
    %6 = vector.broadcast %5 : vector<128x1xf32> to vector<128x128xf32>
    %7 = arith.mulf %4, %6 : vector<128x128xf32>
    %c0_5 = arith.constant 0 : index
    %c0_6 = arith.constant 0 : index
    %c0_7 = arith.constant 0 : index
    %8 = vector.load %arg6[%c0_5, %c0_6, %c0_7] : memref<1x128x128xf32, #tpu.memory_space<vmem>>, vector<1x128x128xf32>
    %9 = vector.shape_cast %8 : vector<1x128x128xf32> to vector<128x128xf32>
    %cst = arith.constant dense<0.000000e+00> : vector<128x128xf32>
    %10 = tpu.matmul %7, %7, %cst {dimension_numbers = #tpu.dot_dimension_numbers<[0], [0], [1], [1], [0, 1, 1, 1], [], []>} : vector<128x128xf32>, vector<128x128xf32>, vector<128x128xf32> -> vector<128x128xf32>
    %11 = arith.addf %9, %10 : vector<128x128xf32>
    %c0_8 = arith.constant 0 : index
    %c0_9 = arith.constant 0 : index
    %c0_10 = arith.constant 0 : index
    %12 = vector.load %arg6[%c0_8, %c0_9, %c0_10] : memref<1x128x128xf32, #tpu.memory_space<vmem>>, vector<1x128x128xf32>
    %13 = vector.shape_cast %12 : vector<1x128x128xf32> to vector<128x128xf32>
    %14 = vector.shape_cast %11 : vector<128x128xf32> to vector<1x128x128xf32>
    tpu.vector_store %arg6[%c0_8, %c0_9, %c0_10], %14 {strides = array<i32>} : memref<1x128x128xf32, #tpu.memory_space<vmem>>, vector<1x128x128xf32>,
    %c2_i32 = arith.constant 2 : i32
    %15 = arith.cmpi eq, %arg1, %c2_i32 : i32
    %16 = arith.extui %15 : i1 to i32
    %c0_i32_11 = arith.constant 0 : i32
    %17 = arith.cmpi ne, %16, %c0_i32_11 : i32
    scf.if %17 {
      %c0_12 = arith.constant 0 : index
      %c0_13 = arith.constant 0 : index
      %c0_14 = arith.constant 0 : index
      %18 = vector.load %arg6[%c0_12, %c0_13, %c0_14] : memref<1x128x128xf32, #tpu.memory_space<vmem>>, vector<1x128x128xf32>
      %19 = vector.shape_cast %18 : vector<1x128x128xf32> to vector<128x128xf32>
      %c0_15 = arith.constant 0 : index
      %c0_16 = arith.constant 0 : index
      %20 = vector.load %arg5[%c0_15, %c0_16] : memref<128x1xf32, #tpu.memory_space<vmem>>, vector<128x1xf32>
      %21 = vector.broadcast %20 : vector<128x1xf32> to vector<128x128xf32>
      %22 = arith.mulf %19, %21 : vector<128x128xf32>
      %c0_17 = arith.constant 0 : index
      %c0_18 = arith.constant 0 : index
      %23 = vector.load %arg4[%c0_17, %c0_18] : memref<1x128xf32, #tpu.memory_space<vmem>>, vector<1x128xf32>
      %24 = vector.broadcast %23 : vector<1x128xf32> to vector<128x128xf32>
      %25 = arith.mulf %22, %24 : vector<128x128xf32>
      %c0_19 = arith.constant 0 : index
      %c0_20 = arith.constant 0 : index
      %c0_21 = arith.constant 0 : index
      %26 = vector.load %arg6[%c0_19, %c0_20, %c0_21] : memref<1x128x128xf32, #tpu.memory_space<vmem>>, vector<1x128x128xf32>
      %27 = vector.shape_cast %26 : vector<1x128x128xf32> to vector<128x128xf32>
      %28 = vector.shape_cast %25 : vector<128x128xf32> to vector<1x128x128xf32>
      tpu.vector_store %arg6[%c0_19, %c0_20, %c0_21], %28 {strides = array<i32>} : memref<1x128x128xf32, #tpu.memory_space<vmem>>, vector<1x128x128xf32>,
    } else {
    }
    return
  }
  func.func @transform_0(%arg0: i32, %arg1: i32) -> (i32, i32, i32) {
    %c0_i32 = arith.constant 0 : i32
    %c0_i32_0 = arith.constant 0 : i32
    return %arg0, %arg1, %c0_i32 : i32, i32, i32
  }
  func.func @transform_1(%arg0: i32, %arg1: i32) -> (i32, i32) {
    %c0_i32 = arith.constant 0 : i32
    %c0_i32_0 = arith.constant 0 : i32
    return %arg1, %c0_i32 : i32, i32
  }
  func.func @transform_2(%arg0: i32, %arg1: i32) -> (i32, i32) {
    %c0_i32 = arith.constant 0 : i32
    %c0_i32_0 = arith.constant 0 : i32
    %c0_i32_1 = arith.constant 0 : i32
    return %c0_i32, %c0_i32_0 : i32, i32
  }
  func.func @transform_3(%arg0: i32, %arg1: i32) -> (i32, i32) {
    %c0_i32 = arith.constant 0 : i32
    %c0_i32_0 = arith.constant 0 : i32
    %c0_i32_1 = arith.constant 0 : i32
    return %c0_i32, %c0_i32_0 : i32, i32
  }
  func.func @transform_4(%arg0: i32, %arg1: i32) -> (i32, i32, i32) {
    %c0_i32 = arith.constant 0 : i32
    %c0_i32_0 = arith.constant 0 : i32
    %c0_i32_1 = arith.constant 0 : i32
    return %arg0, %c0_i32, %c0_i32_0 : i32, i32, i32
  }
}

</mosaic_0001>

<llo_original>
// kernel: tpu_custom_call.1
$region0: #{tpu_custom_call.1}
  #allocation0 [shape = 'u32[]', space=smem, size = 0x4, offset = 0x4, fixed_abs, tag = 'smem constant byte address 0x4 - core index']
  #allocation1 [shape = 'u32[72,128]{1,0:T(1,128)}', space=vmem, size = 0x9000, scoped, tag = 'internal scratch']
  %s0 = inlined_call_operand.hbm [shape: f32[2,384,128], index: 0, kind: input, shape index: {}]
  %s1 = inlined_call_operand.vmem [shape: f32[384,1], index: 1, kind: input, shape index: {}]
  %s2 = inlined_call_operand.vmem [shape: f32[1,128], index: 2, kind: input, shape index: {}]
  %s3 = inlined_call_operand.vmem [shape: f32[128,1], index: 3, kind: input, shape index: {}]
  %s4 = inlined_call_operand.hbm [shape: f32[2,128,128], index: 4, kind: output, shape index: {}]
  %s5 = sld [smem:[#allocation0]]
  $region61: #{tpu_custom_call.1} parent=0
    _
  %s7 = ssub.s32 1, %s5
  %s8 = scalar_select 0, %s7, %s5
  $region1: #{tpu_custom_call.1} parent=0
    #allocation2 [shape = 'u8[131072]{0}', space=vmem, size = 0x20000, scoped, tag = 'input window, operand 0']
    #allocation3 [shape = 's32[2]{0}', space=sflag, size = 0x8, scoped, tag = 'scoped memory for tpu_custom_call.1']
    #allocation4 [shape = 's32[2]{0}', space=sflag, size = 0x8, scoped, tag = 'scoped memory for tpu_custom_call.1']
    #allocation5 [shape = 'u8[131072]{0}', space=vmem, size = 0x20000, scoped, tag = 'output window, operand 0']
    %9 = vsyncpa [#allocation3], 0
    %s10 = scalar_lea.sflag [#allocation3], 1
    %11 = vsyncpa %s10, 0
    %12 = vsyncpa [#allocation4], 0
    %s13 = scalar_lea.sflag [#allocation4], 1
    %14 = vsyncpa %s13, 0
    loop: start=0, step=1, limit=8
    $region2: #{tpu_custom_call.1} parent=1 // loop_pre_header
      _
    $region3: #{tpu_custom_call.1} parent=1 // loop_header
      %s16 = sphi 0, %s20
      %p17 = scmp.ge.s32.totalorder %s16, 8
      %s23 = sphi 0, %s35
      %s24 = sphi 0, %s31
      %s25 = sphi 0, %s23
      %s26 = sphi 0, %s24
      %s27 = sphi 0, %s25
      %s28 = sphi 0, %s26
      %s40 = sphi 0, %s42
      %s43 = sphi 0, %s40
      %s44 = sphi 0, %s43
      %s60 = sphi 0, %s44
      %s66 = sphi 0, %s68
      %s69 = sphi 0, %s66
      %s70 = sphi 0, %s69
      %s86 = sphi 0, %s70
      %s90 = sphi 0, %s90
      %s92 = sphi 0, %s90
      %s93 = sphi 0, %s92
      %s107 = sphi 0, %s93
      %s111 = sphi 0, %s111
      %s113 = sphi 0, %s111
      %s114 = sphi 0, %s113
      %s128 = sphi 0, %s114
      %s134 = sphi 0, %s136
      %s137 = sphi 0, %s134
      %s138 = sphi 0, %s137
      %s154 = sphi 0, %s138
    $region4: #{tpu_custom_call.1} parent=1 // loop_header_branch
      %19 = sbr.rel (%p17) target = $region8
    $region5: #{tpu_custom_call.1} parent=1 // loop_body
      %s21 = ssub.s32 %s16, 1
      %s22 = ssub.s32 %s16, 2
      %s29 = sadd.s32 1, %s24
      %p30 = scmp.ge.s32.totalorder %s29, 3
      %s31 = scalar_select %p30, 0, %s29
      %s32 = sadd.s32 1, %s23
      %s33 = scalar_select %p30, %s32, %s23
      %p34 = scmp.ge.s32.totalorder %s33, 2
      %s35 = scalar_select %p34, 0, %s33
      %s36 = ssub.s32 %s23, %s35
      %s37 = ssub.s32 %s24, %s31
      %s38 = sor.u32 %s36, %s37
      %p39 = scmp.eq.s32.totalorder %s38, 0
      %s41 = sadd.s32 %s40, 1
      %s42 = scalar_select %p39, %s40, %s41
      %p45 = pneg %p39
      %p46 = scmp.eq.s32.totalorder %s16, 5
      %p47 = por %p45, %p46
      %p48 = scmp.ne.s32.totalorder %s40, %s43
      %p49 = scmp.eq.s32.totalorder %s16, 0
      %p50 = por %p48, %p49
      %p51 = scmp.ne.s32.totalorder %s40, %s43
      %p52 = scmp.eq.s32.totalorder %s21, 5
      %p53 = por %p51, %p52
      %p54 = scmp.ne.s32.totalorder %s43, %s44
      %p55 = scmp.eq.s32.totalorder %s21, 0
      %p56 = por %p54, %p55
      %p57 = scmp.ne.s32.totalorder %s43, %s44
      %p58 = scmp.eq.s32.totalorder %s22, 5
      %p59 = por %p57, %p58
      %p61 = scmp.ne.s32.totalorder %s44, %s60
      %p62 = scmp.eq.s32.totalorder %s22, 0
      %p63 = por %p61, %p62
      %s64 = ssub.s32 %s24, %s31
      %p65 = scmp.eq.s32.totalorder %s64, 0
      %s67 = sadd.s32 %s66, 1
      %s68 = scalar_select %p65, %s66, %s67
      %p71 = pneg %p65
      %p72 = scmp.eq.s32.totalorder %s16, 5
      %p73 = por %p71, %p72
      %p74 = scmp.ne.s32.totalorder %s66, %s69
      %p75 = scmp.eq.s32.totalorder %s16, 0
      %p76 = por %p74, %p75
      %p77 = scmp.ne.s32.totalorder %s66, %s69
      %p78 = scmp.eq.s32.totalorder %s21, 5
      %p79 = por %p77, %p78
      %p80 = scmp.ne.s32.totalorder %s69, %s70
      %p81 = scmp.eq.s32.totalorder %s21, 0
      %p82 = por %p80, %p81
      %p83 = scmp.ne.s32.totalorder %s69, %s70
      %p84 = scmp.eq.s32.totalorder %s22, 5
      %p85 = por %p83, %p84
      %p87 = scmp.ne.s32.totalorder %s70, %s86
      %p88 = scmp.eq.s32.totalorder %s22, 0
      %p89 = por %p87, %p88
      %s91 = sadd.s32 %s90, 1
      %p94 = scmp.eq.s32.totalorder %s16, 5
      %p95 = scmp.ne.s32.totalorder %s90, %s92
      %p96 = scmp.eq.s32.totalorder %s16, 0
      %p97 = por %p95, %p96
      %p98 = scmp.ne.s32.totalorder %s90, %s92
      %p99 = scmp.eq.s32.totalorder %s21, 5
      %p100 = por %p98, %p99
      %p101 = scmp.ne.s32.totalorder %s92, %s93
      %p102 = scmp.eq.s32.totalorder %s21, 0
      %p103 = por %p101, %p102
      %p104 = scmp.ne.s32.totalorder %s92, %s93
      %p105 = scmp.eq.s32.totalorder %s22, 5
      %p106 = por %p104, %p105
      %p108 = scmp.ne.s32.totalorder %s93, %s107
      %p109 = scmp.eq.s32.totalorder %s22, 0
      %p110 = por %p108, %p109
      %s112 = sadd.s32 %s111, 1
      %p115 = scmp.eq.s32.totalorder %s16, 5
      %p116 = scmp.ne.s32.totalorder %s111, %s113
      %p117 = scmp.eq.s32.totalorder %s16, 0
      %p118 = por %p116, %p117
      %p119 = scmp.ne.s32.totalorder %s111, %s113
      %p120 = scmp.eq.s32.totalorder %s21, 5
      %p121 = por %p119, %p120
      %p122 = scmp.ne.s32.totalorder %s113, %s114
      %p123 = scmp.eq.s32.totalorder %s21, 0
      %p124 = por %p122, %p123
      %p125 = scmp.ne.s32.totalorder %s113, %s114
      %p126 = scmp.eq.s32.totalorder %s22, 5
      %p127 = por %p125, %p126
      %p129 = scmp.ne.s32.totalorder %s114, %s128
      %p130 = scmp.eq.s32.totalorder %s22, 0
      %p131 = por %p129, %p130
      %s132 = ssub.s32 %s23, %s35
      %p133 = scmp.eq.s32.totalorder %s132, 0
      %s135 = sadd.s32 %s134, 1
      %s136 = scalar_select %p133, %s134, %s135
      %p139 = pneg %p133
      %p140 = scmp.eq.s32.totalorder %s16, 5
      %p141 = por %p139, %p140
      %p142 = scmp.ne.s32.totalorder %s134, %s137
      %p143 = scmp.eq.s32.totalorder %s16, 0
      %p144 = por %p142, %p143
      %p145 = scmp.ne.s32.totalorder %s134, %s137
      %p146 = scmp.eq.s32.totalorder %s21, 5
      %p147 = por %p145, %p146
      %p148 = scmp.ne.s32.totalorder %s137, %s138
      %p149 = scmp.eq.s32.totalorder %s21, 0
      %p150 = por %p148, %p149
      %p151 = scmp.ne.s32.totalorder %s137, %s138
      %p152 = scmp.eq.s32.totalorder %s22, 5
      %p153 = por %p151, %p152
      %p155 = scmp.ne.s32.totalorder %s138, %s154
      %p156 = scmp.eq.s32.totalorder %s22, 0
      %p157 = por %p155, %p156
      %p158 = scmp.le.s32.totalorder 1, %s16
      %p159 = scmp.lt.s32.totalorder %s16, 7
      %p160 = pnand %p158, %p159
      %p161 = pneg %p160
      // Predicated region
      $region9: #{tpu_custom_call.1} parent=5 // pred_check
        _
      $region10: #{tpu_custom_call.1} parent=5 // pred_check_branch
        %163 = sbr.rel (%p160) target = $region12
      $region11: #{tpu_custom_call.1} parent=5 // pred_region
        %s164 = ssub.s32 %s16, 1
        // Predicated region
        $region13: #{tpu_custom_call.1} parent=11 // pred_check
          %p165 = pneg %p103
        $region14: #{tpu_custom_call.1} parent=11 // pred_check_branch
          %167 = sbr.rel (%p165) target = $region16
        $region15: #{tpu_custom_call.1} parent=11 // pred_region
          _
        $region16: #{tpu_custom_call.1} parent=11 // pred_fallthru
          _
        // Predicated region
        $region17: #{tpu_custom_call.1} parent=11 // pred_check
          %p168 = pneg %p124
        $region18: #{tpu_custom_call.1} parent=11 // pred_check_branch
          %170 = sbr.rel (%p168) target = $region20
        $region19: #{tpu_custom_call.1} parent=11 // pred_region
          _
        $region20: #{tpu_custom_call.1} parent=11 // pred_fallthru
          _
      $region12: #{tpu_custom_call.1} parent=5 // pred_fallthru
        _
      %p171 = scmp.lt.s32.totalorder %s16, 6
      // Predicated region
      $region21: #{tpu_custom_call.1} parent=5 // pred_check
        %p172 = pneg %p171
      $region22: #{tpu_custom_call.1} parent=5 // pred_check_branch
        %174 = sbr.rel (%p172) target = $region24
      $region23: #{tpu_custom_call.1} parent=5 // pred_region
        // Predicated region
        $region25: #{tpu_custom_call.1} parent=23 // pred_check
          %p175 = pneg %p50
        $region26: #{tpu_custom_call.1} parent=23 // pred_check_branch
          %177 = sbr.rel (%p175) target = $region28
        $region27: #{tpu_custom_call.1} parent=23 // pred_region
          %s178 = sand.u32 %s40, 1
          %s179 = scalar_lea.sflag [#allocation3], %s178
          %s180 = sand.u32 %s40, 1
          %s181 = smul.addr %s180, 128
          %s182 = scalar_lea.vmem [#allocation2], %s181
          %s183 = smul.u32 16, %s24
          %185 = vsyncadd %s179, 0
          %s186 = smul.addr %s23, 48
          %s187 = sadd.s32 %s183, %s186
          %s188 = smul.addr %s187, 8
          %s189 = scalar_lea.hbm %s0, %s188
          %s190 = sshll.u32 %s189, 4
          %s191 = int_to_ptr.hbm [resolvable:$true] %s190
          %s192 = sshll.u32 %s182, 4
          %s193 = int_to_ptr.vmem [resolvable:$true] %s192
          %198 = dma.hbm_to_vmem [thread:$0]  %s191, 2048, %s193, %s179, 128, 128, 8
        $region28: #{tpu_custom_call.1} parent=23 // pred_fallthru
          _
        // Predicated region
        $region29: #{tpu_custom_call.1} parent=23 // pred_check
          %p199 = pneg %p76
        $region30: #{tpu_custom_call.1} parent=23 // pred_check_branch
          %201 = sbr.rel (%p199) target = $region32
        $region31: #{tpu_custom_call.1} parent=23 // pred_region
          %s202 = smul.u32 16, %s24
          %p203 = scmp.lt.s32.totalorder %s202, 47
          %s204 = scalar_select %p203, %s202, 47
          %s205 = smul.addr %s204, 8
          %s206 = scalar_lea.vmem %s1, %s205
          %s207 = smul.u32 16, %s24
        $region32: #{tpu_custom_call.1} parent=23 // pred_fallthru
          _
      $region24: #{tpu_custom_call.1} parent=5 // pred_fallthru
        _
      %p208 = scmp.le.s32.totalorder 1, %s16
      %p209 = scmp.lt.s32.totalorder %s16, 7
      %p210 = pnand %p208, %p209
      %p211 = pneg %p210
      // Predicated region
      $region33: #{tpu_custom_call.1} parent=5 // pred_check
        _
      $region34: #{tpu_custom_call.1} parent=5 // pred_check_branch
        %213 = sbr.rel (%p210) target = $region36
      $region35: #{tpu_custom_call.1} parent=5 // pred_region
        %s214 = ssub.s32 %s16, 1
        %s215 = sand.u32 %s43, 1
        %s216 = scalar_lea.sflag [#allocation3], %s215
        %s217 = sand.u32 %s43, 1
        %s218 = smul.addr %s217, 128
        %s219 = scalar_lea.vmem [#allocation2], %s218
        // Predicated region
        $region37: #{tpu_custom_call.1} parent=35 // pred_check
          %p220 = pneg %p56
        $region38: #{tpu_custom_call.1} parent=35 // pred_check_branch
          %222 = sbr.rel (%p220) target = $region40
        $region39: #{tpu_custom_call.1} parent=35 // pred_region
          %224 = dma.done %s216, 2048
        $region40: #{tpu_custom_call.1} parent=35 // pred_fallthru
          _
        %s225 = sand.u32 %s43, 1
        %s226 = scalar_lea.sflag [#allocation3], %s225
        %s227 = sand.u32 %s43, 1
        %s228 = smul.addr %s227, 128
        %s229 = scalar_lea.vmem [#allocation2], %s228
        %p230 = pneg %p56
        %p231 = pneg %p53
        %s232 = smul.u32 16, %s26
        %p233 = scmp.lt.s32.totalorder %s232, 47
        %s234 = scalar_select %p233, %s232, 47
        %s235 = smul.addr %s234, 8
        %s236 = scalar_lea.vmem %s1, %s235
        %p237 = pneg %p82
        %p238 = pneg %p79
        %p239 = pneg %p103
        %p240 = pneg %p100
        %p241 = pneg %p124
        %p242 = pneg %p121
        %p243 = pneg %p150
        %p244 = pneg %p147
        %s245 = sand.u32 %s137, 1
        %s246 = scalar_lea.sflag [#allocation4], %s245
        %s247 = sand.u32 %s137, 1
        %s248 = smul.addr %s247, 128
        %s249 = scalar_lea.vmem [#allocation5], %s248
        %s250 = smul.u32 16, %s26
        %s251 = smul.u32 16, %s26
        %p252 = scmp.lt.s32.totalorder %s251, 47
        %s253 = scalar_select %p252, %s251, 47
        %s254 = smul.addr %s253, 8
        %s255 = scalar_lea.vmem %s1, %s254
        %s256 = smul.u32 16, %s26
        %p257 = scmp.eq.s32.totalorder %s26, 0
        // Predicated region
        $region41: #{tpu_custom_call.1} parent=35 // pred_check
          %p258 = pneg %p257
        $region42: #{tpu_custom_call.1} parent=35 // pred_check_branch
          %260 = sbr.rel (%p258) target = $region44
        $region43: #{tpu_custom_call.1} parent=35 // pred_region
          %261 = vst [vmem:[%s249] sm:$0xff] 0.0
          %262 = vst [vmem:[%s249 + $0x8] sm:$0xff] 0.0
          %263 = vst [vmem:[%s249 + $0x10] sm:$0xff] 0.0
          %264 = vst [vmem:[%s249 + $0x18] sm:$0xff] 0.0
          %265 = vst [vmem:[%s249 + $0x20] sm:$0xff] 0.0
          %266 = vst [vmem:[%s249 + $0x28] sm:$0xff] 0.0
          %267 = vst [vmem:[%s249 + $0x30] sm:$0xff] 0.0
          %268 = vst [vmem:[%s249 + $0x38] sm:$0xff] 0.0
          %269 = vst [vmem:[%s249 + $0x40] sm:$0xff] 0.0
          %270 = vst [vmem:[%s249 + $0x48] sm:$0xff] 0.0
          %271 = vst [vmem:[%s249 + $0x50] sm:$0xff] 0.0
          %272 = vst [vmem:[%s249 + $0x58] sm:$0xff] 0.0
          %273 = vst [vmem:[%s249 + $0x60] sm:$0xff] 0.0
          %274 = vst [vmem:[%s249 + $0x68] sm:$0xff] 0.0
          %275 = vst [vmem:[%s249 + $0x70] sm:$0xff] 0.0
          %276 = vst [vmem:[%s249 + $0x78] sm:$0xff] 0.0
        $region44: #{tpu_custom_call.1} parent=35 // pred_fallthru
          _
        %v277 = vld [vmem:[%s219] sm:$0xff]
        %v278 = vld [vmem:[%s219 + $0x8] sm:$0xff]
        %v279 = vld [vmem:[%s219 + $0x10] sm:$0xff]
        %v280 = vld [vmem:[%s219 + $0x18] sm:$0xff]
        %v281 = vld [vmem:[%s219 + $0x20] sm:$0xff]
        %v282 = vld [vmem:[%s219 + $0x28] sm:$0xff]
        %v283 = vld [vmem:[%s219 + $0x30] sm:$0xff]
        %v284 = vld [vmem:[%s219 + $0x38] sm:$0xff]
        %v285 = vld [vmem:[%s219 + $0x40] sm:$0xff]
        %v286 = vld [vmem:[%s219 + $0x48] sm:$0xff]
        %v287 = vld [vmem:[%s219 + $0x50] sm:$0xff]
        %v288 = vld [vmem:[%s219 + $0x58] sm:$0xff]
        %v289 = vld [vmem:[%s219 + $0x60] sm:$0xff]
        %v290 = vld [vmem:[%s219 + $0x68] sm:$0xff]
        %v291 = vld [vmem:[%s219 + $0x70] sm:$0xff]
        %v292 = vld [vmem:[%s219 + $0x78] sm:$0xff]
        %v293 = vld [vmem:[%s255] sm:$0xff]
        %v294 = vld [vmem:[%s255 + $0x8] sm:$0xff]
        %v295 = vld [vmem:[%s255 + $0x10] sm:$0xff]
        %v296 = vld [vmem:[%s255 + $0x18] sm:$0xff]
        %v297 = vld [vmem:[%s255 + $0x20] sm:$0xff]
        %v298 = vld [vmem:[%s255 + $0x28] sm:$0xff]
        %v299 = vld [vmem:[%s255 + $0x30] sm:$0xff]
        %v300 = vld [vmem:[%s255 + $0x38] sm:$0xff]
        %v301 = vld [vmem:[%s255 + $0x40] sm:$0xff]
        %v302 = vld [vmem:[%s255 + $0x48] sm:$0xff]
        %v303 = vld [vmem:[%s255 + $0x50] sm:$0xff]
        %v304 = vld [vmem:[%s255 + $0x58] sm:$0xff]
        %v305 = vld [vmem:[%s255 + $0x60] sm:$0xff]
        %v306 = vld [vmem:[%s255 + $0x68] sm:$0xff]
        %v307 = vld [vmem:[%s255 + $0x70] sm:$0xff]
        %v308 = vld [vmem:[%s255 + $0x78] sm:$0xff]
        %310 = vset.pattern.permute.xlu0 0
        %311 = vperm.xlu0 %310, %v293
        %v312 = vpop.permute.xlu0 %311
        %315 = vset.pattern.permute.xlu0 0
        %316 = vperm.xlu0 %315, %v294
        %v317 = vpop.permute.xlu0 %316
        %320 = vset.pattern.permute.xlu0 0
        %321 = vperm.xlu0 %320, %v295
        %v322 = vpop.permute.xlu0 %321
        %325 = vset.pattern.permute.xlu0 0
        %326 = vperm.xlu0 %325, %v296
        %v327 = vpop.permute.xlu0 %326
        %330 = vset.pattern.permute.xlu0 0
        %331 = vperm.xlu0 %330, %v297
        %v332 = vpop.permute.xlu0 %331
        %335 = vset.pattern.permute.xlu0 0
        %336 = vperm.xlu0 %335, %v298
        %v337 = vpop.permute.xlu0 %336
        %340 = vset.pattern.permute.xlu0 0
        %341 = vperm.xlu0 %340, %v299
        %v342 = vpop.permute.xlu0 %341
        %345 = vset.pattern.permute.xlu0 0
        %346 = vperm.xlu0 %345, %v300
        %v347 = vpop.permute.xlu0 %346
        %350 = vset.pattern.permute.xlu0 0
        %351 = vperm.xlu0 %350, %v301
        %v352 = vpop.permute.xlu0 %351
        %355 = vset.pattern.permute.xlu0 0
        %356 = vperm.xlu0 %355, %v302
        %v357 = vpop.permute.xlu0 %356
        %360 = vset.pattern.permute.xlu0 0
        %361 = vperm.xlu0 %360, %v303
        %v362 = vpop.permute.xlu0 %361
        %365 = vset.pattern.permute.xlu0 0
        %366 = vperm.xlu0 %365, %v304
        %v367 = vpop.permute.xlu0 %366
        %370 = vset.pattern.permute.xlu0 0
        %371 = vperm.xlu0 %370, %v305
        %v372 = vpop.permute.xlu0 %371
        %375 = vset.pattern.permute.xlu0 0
        %376 = vperm.xlu0 %375, %v306
        %v377 = vpop.permute.xlu0 %376
        %380 = vset.pattern.permute.xlu0 0
        %381 = vperm.xlu0 %380, %v307
        %v382 = vpop.permute.xlu0 %381
        %385 = vset.pattern.permute.xlu0 0
        %386 = vperm.xlu0 %385, %v308
        %v387 = vpop.permute.xlu0 %386
        %v389 = vmul.f32 %v277, %v312
        %v390 = vmul.f32 %v278, %v317
        %v391 = vmul.f32 %v279, %v322
        %v392 = vmul.f32 %v280, %v327
        %v393 = vmul.f32 %v281, %v332
        %v394 = vmul.f32 %v282, %v337
        %v395 = vmul.f32 %v283, %v342
        %v396 = vmul.f32 %v284, %v347
        %v397 = vmul.f32 %v285, %v352
        %v398 = vmul.f32 %v286, %v357
        %v399 = vmul.f32 %v287, %v362
        %v400 = vmul.f32 %v288, %v367
        %v401 = vmul.f32 %v289, %v372
        %v402 = vmul.f32 %v290, %v377
        %v403 = vmul.f32 %v291, %v382
        %v404 = vmul.f32 %v292, %v387
        %v405 = vld [vmem:[%s249] sm:$0xff]
        %v406 = vld [vmem:[%s249 + $0x8] sm:$0xff]
        %v407 = vld [vmem:[%s249 + $0x10] sm:$0xff]
        %v408 = vld [vmem:[%s249 + $0x18] sm:$0xff]
        %v409 = vld [vmem:[%s249 + $0x20] sm:$0xff]
        %v410 = vld [vmem:[%s249 + $0x28] sm:$0xff]
        %v411 = vld [vmem:[%s249 + $0x30] sm:$0xff]
        %v412 = vld [vmem:[%s249 + $0x38] sm:$0xff]
        %v413 = vld [vmem:[%s249 + $0x40] sm:$0xff]
        %v414 = vld [vmem:[%s249 + $0x48] sm:$0xff]
        %v415 = vld [vmem:[%s249 + $0x50] sm:$0xff]
        %v416 = vld [vmem:[%s249 + $0x58] sm:$0xff]
        %v417 = vld [vmem:[%s249 + $0x60] sm:$0xff]
        %v418 = vld [vmem:[%s249 + $0x68] sm:$0xff]
        %v419 = vld [vmem:[%s249 + $0x70] sm:$0xff]
        %v420 = vld [vmem:[%s249 + $0x78] sm:$0xff]
        %421 = vxpose.xlu0.b32.start [1/16] %v389, 128
        %422 = vxpose.xlu0.b32.cont [2/16] %v390, 128
        %423 = vxpose.xlu0.b32.cont [3/16] %v391, 128
        %424 = vxpose.xlu0.b32.cont [4/16] %v392, 128
        %425 = vxpose.xlu0.b32.cont [5/16] %v393, 128
        %426 = vxpose.xlu0.b32.cont [6/16] %v394, 128
        %427 = vxpose.xlu0.b32.cont [7/16] %v395, 128
        %428 = vxpose.xlu0.b32.cont [8/16] %v396, 128
        %429 = vxpose.xlu0.b32.cont [9/16] %v397, 128
        %430 = vxpose.xlu0.b32.cont [10/16] %v398, 128
        %431 = vxpose.xlu0.b32.cont [11/16] %v399, 128
        %432 = vxpose.xlu0.b32.cont [12/16] %v400, 128
        %433 = vxpose.xlu0.b32.cont [13/16] %v401, 128
        %434 = vxpose.xlu0.b32.cont [14/16] %v402, 128
        %435 = vxpose.xlu0.b32.cont [15/16] %v403, 128
        %436 = vxpose.xlu0.b32.end [16/16] %v404, 128
        %v437 = vpop.trf.xlu0
        %v438 = vpop.trf.xlu0
        %v439 = vpop.trf.xlu0
        %v440 = vpop.trf.xlu0
        %v441 = vpop.trf.xlu0
        %v442 = vpop.trf.xlu0
        %v443 = vpop.trf.xlu0
        %v444 = vpop.trf.xlu0
        %v445 = vpop.trf.xlu0
        %v446 = vpop.trf.xlu0
        %v447 = vpop.trf.xlu0
        %v448 = vpop.trf.xlu0
        %v449 = vpop.trf.xlu0
        %v450 = vpop.trf.xlu0
        %v451 = vpop.trf.xlu0
        %v452 = vpop.trf.xlu0
        %453 = vmatpush.msra.mxu0 %v404
        %454 = vmatpush.msra.mxu0 %v403
        %455 = vmatpush.msra.mxu0 %v402
        %456 = vmatpush.msra.mxu0 %v401
        %457 = vmatpush.msra.mxu0 %v400
        %458 = vmatpush.msra.mxu0 %v399
        %459 = vmatpush.msra.mxu0 %v398
        %460 = vmatpush.msra.mxu0 %v397
        %461 = vmatpush.msra.mxu0 %v396
        %462 = vmatpush.msra.mxu0 %v395
        %463 = vmatpush.msra.mxu0 %v394
        %464 = vmatpush.msra.mxu0 %v393
        %465 = vmatpush.msra.mxu0 %v392
        %466 = vmatpush.msra.mxu0 %v391
        %467 = vmatpush.msra.mxu0 %v390
        %468 = vmatpush.msra.mxu0 %v389
        %469 = vmatmul.f32.gmra.mxu0 %v437
        %v470 = vpop.f32.mrf.mxu0
        %v471 = vadd.f32 0.0, %v470
        %472 = vmatmul.f32.gmra.mxu0 %v438
        %v473 = vpop.f32.mrf.mxu0
        %v474 = vadd.f32 0.0, %v473
        %475 = vmatmul.f32.gmra.mxu0 %v439
        %v476 = vpop.f32.mrf.mxu0
        %v477 = vadd.f32 0.0, %v476
        %478 = vmatmul.f32.gmra.mxu0 %v440
        %v479 = vpop.f32.mrf.mxu0
        %v480 = vadd.f32 0.0, %v479
        %481 = vmatmul.f32.gmra.mxu0 %v441
        %v482 = vpop.f32.mrf.mxu0
        %v483 = vadd.f32 0.0, %v482
        %484 = vmatmul.f32.gmra.mxu0 %v442
        %v485 = vpop.f32.mrf.mxu0
        %v486 = vadd.f32 0.0, %v485
        %487 = vmatmul.f32.gmra.mxu0 %v443
        %v488 = vpop.f32.mrf.mxu0
        %v489 = vadd.f32 0.0, %v488
        %490 = vmatmul.f32.gmra.mxu0 %v444
        %v491 = vpop.f32.mrf.mxu0
        %v492 = vadd.f32 0.0, %v491
        %493 = vmatmul.f32.gmra.mxu0 %v445
        %v494 = vpop.f32.mrf.mxu0
        %v495 = vadd.f32 0.0, %v494
        %496 = vmatmul.f32.gmra.mxu0 %v446
        %v497 = vpop.f32.mrf.mxu0
        %v498 = vadd.f32 0.0, %v497
        %499 = vmatmul.f32.gmra.mxu0 %v447
        %v500 = vpop.f32.mrf.mxu0
        %v501 = vadd.f32 0.0, %v500
        %502 = vmatmul.f32.gmra.mxu0 %v448
        %v503 = vpop.f32.mrf.mxu0
        %v504 = vadd.f32 0.0, %v503
        %505 = vmatmul.f32.gmra.mxu0 %v449
        %v506 = vpop.f32.mrf.mxu0
        %v507 = vadd.f32 0.0, %v506
        %508 = vmatmul.f32.gmra.mxu0 %v450
        %v509 = vpop.f32.mrf.mxu0
        %v510 = vadd.f32 0.0, %v509
        %511 = vmatmul.f32.gmra.mxu0 %v451
        %v512 = vpop.f32.mrf.mxu0
        %v513 = vadd.f32 0.0, %v512
        %514 = vmatmul.f32.gmra.mxu0 %v452
        %v515 = vpop.f32.mrf.mxu0
        %v516 = vadd.f32 0.0, %v515
        %517 = vdwg.mxu0
        %v518 = vadd.f32 %v405, %v471
        %v519 = vadd.f32 %v406, %v474
        %v520 = vadd.f32 %v407, %v477
        %v521 = vadd.f32 %v408, %v480
        %v522 = vadd.f32 %v409, %v483
        %v523 = vadd.f32 %v410, %v486
        %v524 = vadd.f32 %v411, %v489
        %v525 = vadd.f32 %v412, %v492
        %v526 = vadd.f32 %v413, %v495
        %v527 = vadd.f32 %v414, %v498
        %v528 = vadd.f32 %v415, %v501
        %v529 = vadd.f32 %v416, %v504
        %v530 = vadd.f32 %v417, %v507
        %v531 = vadd.f32 %v418, %v510
        %v532 = vadd.f32 %v419, %v513
        %v533 = vadd.f32 %v420, %v516
        %534 = vst [vmem:[%s249] sm:$0xff] %v518
        %535 = vst [vmem:[%s249 + $0x8] sm:$0xff] %v519
        %536 = vst [vmem:[%s249 + $0x10] sm:$0xff] %v520
        %537 = vst [vmem:[%s249 + $0x18] sm:$0xff] %v521
        %538 = vst [vmem:[%s249 + $0x20] sm:$0xff] %v522
        %539 = vst [vmem:[%s249 + $0x28] sm:$0xff] %v523
        %540 = vst [vmem:[%s249 + $0x30] sm:$0xff] %v524
        %541 = vst [vmem:[%s249 + $0x38] sm:$0xff] %v525
        %542 = vst [vmem:[%s249 + $0x40] sm:$0xff] %v526
        %543 = vst [vmem:[%s249 + $0x48] sm:$0xff] %v527
        %544 = vst [vmem:[%s249 + $0x50] sm:$0xff] %v528
        %545 = vst [vmem:[%s249 + $0x58] sm:$0xff] %v529
        %546 = vst [vmem:[%s249 + $0x60] sm:$0xff] %v530
        %547 = vst [vmem:[%s249 + $0x68] sm:$0xff] %v531
        %548 = vst [vmem:[%s249 + $0x70] sm:$0xff] %v532
        %549 = vst [vmem:[%s249 + $0x78] sm:$0xff] %v533
        %p550 = scmp.eq.s32.totalorder %s26, 2
        // Predicated region
        $region45: #{tpu_custom_call.1} parent=35 // pred_check
          %p551 = pneg %p550
        $region46: #{tpu_custom_call.1} parent=35 // pred_check_branch
          %553 = sbr.rel (%p551) target = $region48
        $region47: #{tpu_custom_call.1} parent=35 // pred_region
          %v554 = vld [vmem:[%s249] sm:$0xff]
          %v555 = vld [vmem:[%s249 + $0x8] sm:$0xff]
          %v556 = vld [vmem:[%s249 + $0x10] sm:$0xff]
          %v557 = vld [vmem:[%s249 + $0x18] sm:$0xff]
          %v558 = vld [vmem:[%s249 + $0x20] sm:$0xff]
          %v559 = vld [vmem:[%s249 + $0x28] sm:$0xff]
          %v560 = vld [vmem:[%s249 + $0x30] sm:$0xff]
          %v561 = vld [vmem:[%s249 + $0x38] sm:$0xff]
          %v562 = vld [vmem:[%s249 + $0x40] sm:$0xff]
          %v563 = vld [vmem:[%s249 + $0x48] sm:$0xff]
          %v564 = vld [vmem:[%s249 + $0x50] sm:$0xff]
          %v565 = vld [vmem:[%s249 + $0x58] sm:$0xff]
          %v566 = vld [vmem:[%s249 + $0x60] sm:$0xff]
          %v567 = vld [vmem:[%s249 + $0x68] sm:$0xff]
          %v568 = vld [vmem:[%s249 + $0x70] sm:$0xff]
          %v569 = vld [vmem:[%s249 + $0x78] sm:$0xff]
          %v570 = vld [vmem:[%s3] sm:$0xff]
          %v571 = vld [vmem:[%s3 + $0x8] sm:$0xff]
          %v572 = vld [vmem:[%s3 + $0x10] sm:$0xff]
          %v573 = vld [vmem:[%s3 + $0x18] sm:$0xff]
          %v574 = vld [vmem:[%s3 + $0x20] sm:$0xff]
          %v575 = vld [vmem:[%s3 + $0x28] sm:$0xff]
          %v576 = vld [vmem:[%s3 + $0x30] sm:$0xff]
          %v577 = vld [vmem:[%s3 + $0x38] sm:$0xff]
          %v578 = vld [vmem:[%s3 + $0x40] sm:$0xff]
          %v579 = vld [vmem:[%s3 + $0x48] sm:$0xff]
          %v580 = vld [vmem:[%s3 + $0x50] sm:$0xff]
          %v581 = vld [vmem:[%s3 + $0x58] sm:$0xff]
          %v582 = vld [vmem:[%s3 + $0x60] sm:$0xff]
          %v583 = vld [vmem:[%s3 + $0x68] sm:$0xff]
          %v584 = vld [vmem:[%s3 + $0x70] sm:$0xff]
          %v585 = vld [vmem:[%s3 + $0x78] sm:$0xff]
          %587 = vset.pattern.permute.xlu0 0
          %588 = vperm.xlu0 %587, %v570
          %v589 = vpop.permute.xlu0 %588
          %592 = vset.pattern.permute.xlu0 0
          %593 = vperm.xlu0 %592, %v571
          %v594 = vpop.permute.xlu0 %593
          %597 = vset.pattern.permute.xlu0 0
          %598 = vperm.xlu0 %597, %v572
          %v599 = vpop.permute.xlu0 %598
          %602 = vset.pattern.permute.xlu0 0
          %603 = vperm.xlu0 %602, %v573
          %v604 = vpop.permute.xlu0 %603
          %607 = vset.pattern.permute.xlu0 0
          %608 = vperm.xlu0 %607, %v574
          %v609 = vpop.permute.xlu0 %608
          %612 = vset.pattern.permute.xlu0 0
          %613 = vperm.xlu0 %612, %v575
          %v614 = vpop.permute.xlu0 %613
          %617 = vset.pattern.permute.xlu0 0
          %618 = vperm.xlu0 %617, %v576
          %v619 = vpop.permute.xlu0 %618
          %622 = vset.pattern.permute.xlu0 0
          %623 = vperm.xlu0 %622, %v577
          %v624 = vpop.permute.xlu0 %623
          %627 = vset.pattern.permute.xlu0 0
          %628 = vperm.xlu0 %627, %v578
          %v629 = vpop.permute.xlu0 %628
          %632 = vset.pattern.permute.xlu0 0
          %633 = vperm.xlu0 %632, %v579
          %v634 = vpop.permute.xlu0 %633
          %637 = vset.pattern.permute.xlu0 0
          %638 = vperm.xlu0 %637, %v580
          %v639 = vpop.permute.xlu0 %638
          %642 = vset.pattern.permute.xlu0 0
          %643 = vperm.xlu0 %642, %v581
          %v644 = vpop.permute.xlu0 %643
          %647 = vset.pattern.permute.xlu0 0
          %648 = vperm.xlu0 %647, %v582
          %v649 = vpop.permute.xlu0 %648
          %652 = vset.pattern.permute.xlu0 0
          %653 = vperm.xlu0 %652, %v583
          %v654 = vpop.permute.xlu0 %653
          %657 = vset.pattern.permute.xlu0 0
          %658 = vperm.xlu0 %657, %v584
          %v659 = vpop.permute.xlu0 %658
          %662 = vset.pattern.permute.xlu0 0
          %663 = vperm.xlu0 %662, %v585
          %v664 = vpop.permute.xlu0 %663
          %v666 = vmul.f32 %v554, %v589
          %v667 = vmul.f32 %v555, %v594
          %v668 = vmul.f32 %v556, %v599
          %v669 = vmul.f32 %v557, %v604
          %v670 = vmul.f32 %v558, %v609
          %v671 = vmul.f32 %v559, %v614
          %v672 = vmul.f32 %v560, %v619
          %v673 = vmul.f32 %v561, %v624
          %v674 = vmul.f32 %v562, %v629
          %v675 = vmul.f32 %v563, %v634
          %v676 = vmul.f32 %v564, %v639
          %v677 = vmul.f32 %v565, %v644
          %v678 = vmul.f32 %v566, %v649
          %v679 = vmul.f32 %v567, %v654
          %v680 = vmul.f32 %v568, %v659
          %v681 = vmul.f32 %v569, %v664
          %v682 = vld [vmem:[%s2] sm:$0x1]
          %v684 = vperm.slane %v682, 0
          %v686 = vmul.f32 %v666, %v684
          %v687 = vmul.f32 %v667, %v684
          %v688 = vmul.f32 %v668, %v684
          %v689 = vmul.f32 %v669, %v684
          %v690 = vmul.f32 %v670, %v684
          %v691 = vmul.f32 %v671, %v684
          %v692 = vmul.f32 %v672, %v684
          %v693 = vmul.f32 %v673, %v684
          %v694 = vmul.f32 %v674, %v684
          %v695 = vmul.f32 %v675, %v684
          %v696 = vmul.f32 %v676, %v684
          %v697 = vmul.f32 %v677, %v684
          %v698 = vmul.f32 %v678, %v684
          %v699 = vmul.f32 %v679, %v684
          %v700 = vmul.f32 %v680, %v684
          %v701 = vmul.f32 %v681, %v684
          %702 = vst [vmem:[%s249] sm:$0xff] %v686
          %703 = vst [vmem:[%s249 + $0x8] sm:$0xff] %v687
          %704 = vst [vmem:[%s249 + $0x10] sm:$0xff] %v688
          %705 = vst [vmem:[%s249 + $0x18] sm:$0xff] %v689
          %706 = vst [vmem:[%s249 + $0x20] sm:$0xff] %v690
          %707 = vst [vmem:[%s249 + $0x28] sm:$0xff] %v691
          %708 = vst [vmem:[%s249 + $0x30] sm:$0xff] %v692
          %709 = vst [vmem:[%s249 + $0x38] sm:$0xff] %v693
          %710 = vst [vmem:[%s249 + $0x40] sm:$0xff] %v694
          %711 = vst [vmem:[%s249 + $0x48] sm:$0xff] %v695
          %712 = vst [vmem:[%s249 + $0x50] sm:$0xff] %v696
          %713 = vst [vmem:[%s249 + $0x58] sm:$0xff] %v697
          %714 = vst [vmem:[%s249 + $0x60] sm:$0xff] %v698
          %715 = vst [vmem:[%s249 + $0x68] sm:$0xff] %v699
          %716 = vst [vmem:[%s249 + $0x70] sm:$0xff] %v700
          %717 = vst [vmem:[%s249 + $0x78] sm:$0xff] %v701
        $region48: #{tpu_custom_call.1} parent=35 // pred_fallthru
          _
        %s718 = sand.u32 %s137, 1
        %s719 = scalar_lea.sflag [#allocation4], %s718
        %s720 = sand.u32 %s137, 1
        %s721 = smul.addr %s720, 128
        %s722 = scalar_lea.vmem [#allocation5], %s721
        // Predicated region
        $region49: #{tpu_custom_call.1} parent=35 // pred_check
          %p723 = pneg %p147
        $region50: #{tpu_custom_call.1} parent=35 // pred_check_branch
          %725 = sbr.rel (%p723) target = $region52
        $region51: #{tpu_custom_call.1} parent=35 // pred_region
          %727 = vsyncadd %s719, 0
          %s728 = smul.addr %s25, 16
          %s729 = smul.addr %s728, 8
          %s730 = scalar_lea.hbm %s4, %s729
          %s731 = sshll.u32 %s722, 4
          %s732 = int_to_ptr.vmem [resolvable:$true] %s731
          %s733 = sshll.u32 %s730, 4
          %s734 = int_to_ptr.hbm [resolvable:$true] %s733
          %739 = dma.vmem_to_hbm [thread:$0]  %s732, 2048, %s734, %s719, 128, 128, 8
        $region52: #{tpu_custom_call.1} parent=35 // pred_fallthru
          _
      $region36: #{tpu_custom_call.1} parent=5 // pred_fallthru
        _
      %p740 = scmp.le.s32.totalorder 2, %s16
      // Predicated region
      $region53: #{tpu_custom_call.1} parent=5 // pred_check
        %p741 = pneg %p740
      $region54: #{tpu_custom_call.1} parent=5 // pred_check_branch
        %743 = sbr.rel (%p741) target = $region56
      $region55: #{tpu_custom_call.1} parent=5 // pred_region
        %s744 = ssub.s32 %s16, 2
        // Predicated region
        $region57: #{tpu_custom_call.1} parent=55 // pred_check
          %p745 = pneg %p153
        $region58: #{tpu_custom_call.1} parent=55 // pred_check_branch
          %747 = sbr.rel (%p745) target = $region60
        $region59: #{tpu_custom_call.1} parent=55 // pred_region
          %s748 = sand.u32 %s138, 1
          %s749 = scalar_lea.sflag [#allocation4], %s748
          %s750 = sand.u32 %s138, 1
          %s751 = smul.addr %s750, 128
          %s752 = scalar_lea.vmem [#allocation5], %s751
          %754 = dma.done %s749, 2048
        $region60: #{tpu_custom_call.1} parent=55 // pred_fallthru
          _
      $region56: #{tpu_custom_call.1} parent=5 // pred_fallthru
        _
    $region6: #{tpu_custom_call.1} parent=1 // loop_footer
      %s20 = sadd.s32 1, %s16
    $region7: #{tpu_custom_call.1} parent=1 // loop_footer_branch
      %15 = sbr.rel target = $region3
    $region8: #{tpu_custom_call.1} parent=1 // loop_exit
      _
    %755 = vsyncpa [#allocation3], 1
    %s756 = scalar_lea.sflag [#allocation3], 1
    %757 = vsyncpa %s756, 1
    %758 = vsyncpa [#allocation4], 1
    %s759 = scalar_lea.sflag [#allocation4], 1
    %760 = vsyncpa %s759, 1

</llo_original>
